<compile_context>
chip_gen: v5e
topology: v5e:2x2
jax: 0.10.0
libtpu: 0.0.40
codegen_flags: <defaults>
</compile_context>

<pallas_src>
import functools

import jax
import jax.numpy as jnp
from jax.experimental import pallas as pl
from jax.experimental.pallas import tpu as pltpu


def _cdiv(a, b):
    return -(-a // b)


def _round_up(x, m):
    return _cdiv(x, m) * m


@functools.lru_cache(maxsize=None)
def _tpu_config():
    """Per-generation tiling caps / VMEM budgets (static, trace-time only)."""
    vmem = None
    kind = ""
    try:
        info = pltpu.get_tpu_info()
        vmem = int(getattr(info, "vmem_capacity_bytes", 0)) or None
    except Exception:
        pass
    try:
        kind = jax.devices()[0].device_kind.lower()
    except Exception:
        kind = ""
    if vmem is None:
        vmem = (64 << 20) if "v7" in kind else (128 << 20)

    if "v7" in kind or vmem <= (64 << 20):
        # v7x: 64 MiB VMEM per TensorCore, 2 TCs/chip -> keep the working set
        # ~<=26 MiB and make sure the parallel grid has >= 2 blocks.
        return dict(cap_m=1024, cap_n=512, cap_k=1024,
                    tile_budget=min(vmem // 2, 26 << 20),
                    vmem_limit=min(vmem * 3 // 4, 48 << 20),
                    multi_tc=True)
    if "v6" in kind:
        # v6e: 128 MiB VMEM, ridge ~640 flop/byte -> 1024-class output tiles.
        return dict(cap_m=1024, cap_n=1024, cap_k=1024,
                    tile_budget=min(vmem // 2, 48 << 20),
                    vmem_limit=min(vmem * 3 // 4, 96 << 20),
                    multi_tc=False)
    if "v5 lite" in kind or "v5e" in kind or "v5lite" in kind:
        # v5e: ridge ~240 flop/byte -> 512x512 is already MXU-bound; keep tk
        # large so the per-k accumulator RMW (single vst slot) stays rare.
        return dict(cap_m=512, cap_n=512, cap_k=1024,
                    tile_budget=min(vmem // 4, 32 << 20),
                    vmem_limit=min(vmem * 3 // 4, 96 << 20),
                    multi_tc=False)
    # Unknown / other (v4, v5p, ...): conservative caps; v4/v5p have two
    # TensorCores per chip, so allow the parallel-grid split there.
    multi = ("v4" in kind) or ("v5p" in kind)
    return dict(cap_m=1024, cap_n=512, cap_k=1024,
                tile_budget=min(vmem // 2, 32 << 20),
                vmem_limit=min(vmem * 3 // 4, 64 << 20),
                multi_tc=multi)


def _pick_tile(dim, cap, multiple):
    """Largest tile <= cap that minimizes padding of `dim`.

    A block equal to the full (even unaligned) dim is always legal, so small
    dims become a single block with zero padding.  Larger dims prefer an
    exact `multiple`-aligned divisor near the cap (padding limited to the
    alignment round-up); only as a last resort take a balanced round-up.
    """
    if dim <= cap:
        return dim
    units = _cdiv(dim, multiple)
    cap_units = max(1, cap // multiple)
    for d in range(cap_units, max(1, cap_units // 2) - 1, -1):
        if units % d == 0:
            return d * multiple
    nblocks = _cdiv(units, cap_units)
    return _cdiv(units, nblocks) * multiple


def _choose_tiles(M, N, K, in_bytes, out_bytes, use_acc_scratch, cfg):
    """Pick (tm, tn, tk): big output tiles, minimal padding, VMEM-budgeted."""
    sub = max(8, 8 * (4 // max(1, in_bytes)))   # 8/f32, 16/bf16, 32/int8
    tm = _pick_tile(M, cfg["cap_m"], sub)
    tn = _pick_tile(N, cfg["cap_n"], 128)
    tk = _pick_tile(K, cfg["cap_k"], 128)

    def footprint(tm_, tn_, tk_):
        b = 2 * (tm_ * tk_ + tk_ * tn_) * in_bytes + 2 * tm_ * tn_ * out_bytes
        if use_acc_scratch:
            b += tm_ * tn_ * 4
        return b

    # Shrink tk first (it does not change arithmetic intensity), but keep it
    # >= 512 as long as possible; then tn, then tm.
    while footprint(tm, tn, tk) > cfg["tile_budget"]:
        if tk > 512:
            tk = max(128, _round_up(tk // 2, 128))
        elif tn > 256:
            tn = max(128, _round_up(tn // 2, 128))
        elif tm > 256:
            tm = max(sub, _round_up(tm // 2, sub))
        elif tk > 128:
            tk = max(128, _round_up(tk // 2, 128))
        elif tn > 128:
            tn = max(128, _round_up(tn // 2, 128))
        elif tm > sub:
            tm = max(sub, _round_up(tm // 2, sub))
        else:
            break

    # Only chips with 2 TensorCores benefit from forcing >= 2 parallel blocks
    # (splitting tn keeps each core streaming a disjoint half of the weight).
    if cfg["multi_tc"] and _cdiv(M, tm) * _cdiv(N, tn) < 2:
        if tn > 128:
            tn = max(128, _round_up(tn // 2, 128))
        elif tm > sub:
            tm = max(sub, _round_up(tm // 2, sub))
    return tm, tn, tk


def _make_linear_kernel(has_bias, use_acc_scratch, single_k):
    """Kernel specialized on (bias?, f32-scratch accumulator?, single-K?)."""

    if single_k:
        # Whole reduction in one tile: no pl.when, no accumulator RMW.
        def kernel(*refs):
            if has_bias:
                x_ref, w_ref, b_ref, o_ref = refs
            else:
                x_ref, w_ref, o_ref = refs
                b_ref = None
            acc = jnp.dot(x_ref[...], w_ref[...],
                          preferred_element_type=jnp.float32)
            if has_bias:
                acc = acc + b_ref[...].astype(jnp.float32)
            o_ref[...] = acc.astype(o_ref.dtype)
        return kernel

    def kernel(*refs):
        if has_bias and use_acc_scratch:
            x_ref, w_ref, b_ref, o_ref, acc_ref = refs
        elif has_bias:
            x_ref, w_ref, b_ref, o_ref = refs
            acc_ref = None
        elif use_acc_scratch:
            x_ref, w_ref, o_ref, acc_ref = refs
            b_ref = None
        else:
            x_ref, w_ref, o_ref = refs
            b_ref = None
            acc_ref = None

        acc = acc_ref if use_acc_scratch else o_ref   # f32 out: accumulate in place
        k = pl.program_id(2)

        # Fold the bias into the accumulator init so the epilogue is a pure cast.
        @pl.when(k == 0)
        def _():
            if has_bias:
                acc[...] = jnp.broadcast_to(
                    b_ref[...].astype(jnp.float32), acc.shape)
            else:
                acc[...] = jnp.zeros_like(acc)

        acc[...] += jnp.dot(x_ref[...], w_ref[...],
                            preferred_element_type=jnp.float32)

        if use_acc_scratch:
            @pl.when(k == pl.num_programs(2) - 1)
            def _():
                o_ref[...] = acc_ref[...].astype(o_ref.dtype)

    return kernel


@functools.partial(jax.jit, static_argnames=("tm", "tn", "tk", "compute_dtype"))
def ipex_transformer_linear(x, weight, bias=None, *, tm=None, tn=None, tk=None,
                            compute_dtype=None):
    """out = x @ weight + bias  (torch_ipex.matmul_bias_out semantics)."""
    *lead, K = x.shape
    Kw, N = weight.shape
    assert K == Kw, (K, Kw)
    out_dtype = x.dtype

    x2d = x.reshape(-1, K)
    M = x2d.shape[0]

    # Optional reduced-precision MXU path (bf16: 2-4x MXU rate, half the
    # weight HBM/VMEM traffic); accumulation stays f32 either way.  The
    # weight should already be pre-cast at module init (IPEXTransformerLinear
    # below), so no per-call weight copy is made here in the common case.
    if compute_dtype is not None:
        if x2d.dtype != compute_dtype:
            x2d = x2d.astype(compute_dtype)
        if weight.dtype != compute_dtype:
            weight = weight.astype(compute_dtype)   # fallback only
    elif weight.dtype != x2d.dtype:
        cdt = (weight.dtype if weight.dtype.itemsize < x2d.dtype.itemsize
               else x2d.dtype)
        x2d = x2d.astype(cdt)
        weight = weight.astype(cdt)

    in_bytes = x2d.dtype.itemsize
    out_bytes = jnp.dtype(out_dtype).itemsize
    use_acc_scratch = out_dtype != jnp.float32   # f32 out: accumulate in place
    has_bias = bias is not None

    cfg = _tpu_config()
    atm, atn, atk = _choose_tiles(M, N, K, in_bytes, out_bytes,
                                  use_acc_scratch, cfg)
    tm = atm if tm is None else tm
    tn = atn if tn is None else tn
    tk = atk if tk is None else tk

    # Padding (K-padding with zeros is exact; padded rows/cols sliced below).
    # _pick_tile keeps this a no-op for the common shapes; the weight is only
    # padded when N/K exceed a single tile AND have no aligned divisor.
    M_pad, N_pad, K_pad = _round_up(M, tm), _round_up(N, tn), _round_up(K, tk)
    if (M_pad, K_pad) != (M, K):
        x2d = jnp.pad(x2d, ((0, M_pad - M), (0, K_pad - K)))
    w2d = weight
    if (K_pad, N_pad) != (K, N):
        w2d = jnp.pad(w2d, ((0, K_pad - K), (0, N_pad - N)))

    grid_m, grid_n, grid_k = M_pad // tm, N_pad // tn, K_pad // tk
    single_k = grid_k == 1

    if single_k:
        grid = (grid_m, grid_n)
        x_spec = pl.BlockSpec((tm, tk), lambda i, j: (i, 0))
        w_spec = pl.BlockSpec((tk, tn), lambda i, j: (0, j))
        b_spec = pl.BlockSpec((1, tn), lambda i, j: (0, j))
        o_spec = pl.BlockSpec((tm, tn), lambda i, j: (i, j))
        semantics = ("parallel", "parallel")
    else:
        grid = (grid_m, grid_n, grid_k)
        x_spec = pl.BlockSpec((tm, tk), lambda i, j, k: (i, k))
        w_spec = pl.BlockSpec((tk, tn), lambda i, j, k: (k, j))
        b_spec = pl.BlockSpec((1, tn), lambda i, j, k: (0, j))
        o_spec = pl.BlockSpec((tm, tn), lambda i, j, k: (i, j))
        semantics = ("parallel", "parallel", "arbitrary")

    in_specs = [x_spec, w_spec]
    operands = [x2d, w2d]
    if has_bias:
        b2d = bias.reshape(1, N)
        if N_pad != N:
            b2d = jnp.pad(b2d, ((0, 0), (0, N_pad - N)))
        in_specs.append(b_spec)
        operands.append(b2d)

    scratch_shapes = []
    if use_acc_scratch and not single_k:
        scratch_shapes.append(pltpu.VMEM((tm, tn), jnp.float32))

    # Advisory cost: count actual re-streaming (x read once per j-block, w
    # read once per i-block), not a single pass of each operand.
    flops = 2 * M_pad * N_pad * K_pad
    bytes_accessed = (
        grid_n * M_pad * K_pad * in_bytes
        + grid_m * K_pad * N_pad * in_bytes
        + M_pad * N_pad * out_bytes
        + (grid_m * N_pad * bias.dtype.itemsize if has_bias else 0))

    out2d = pl.pallas_call(
        _make_linear_kernel(has_bias, use_acc_scratch, single_k),
        out_shape=jax.ShapeDtypeStruct((M_pad, N_pad), out_dtype),
        grid_spec=pltpu.PrefetchScalarGridSpec(
            num_scalar_prefetch=0,
            grid=grid,
            in_specs=in_specs,
            out_specs=o_spec,
            scratch_shapes=scratch_shapes,
        ),
        compiler_params=pltpu.CompilerParams(
            dimension_semantics=semantics,
            vmem_limit_bytes=int(cfg["vmem_limit"]),
        ),
        cost_estimate=pl.CostEstimate(
            flops=flops, transcendentals=0, bytes_accessed=bytes_accessed),
    )(*operands)

    out2d = out2d[:M, :N]
    return out2d.reshape(*lead, N)


class IPEXTransformerLinear:
    """JAX mirror of the IPEX module.

    `weight` is (in_features, out_features) -- IPEX pre-transposes the
    nn.Linear weight before stashing it in this module.  If `compute_dtype`
    (e.g. jnp.bfloat16) is given, the weight is pre-cast ONCE here so the
    per-call kernel never re-reads the f32 weight just to write a narrow copy
    back to HBM; accumulation remains f32 inside the kernel.
    """

    def __init__(self, weight=None, bias=None, compute_dtype=None):
        if weight is not None and compute_dtype is not None:
            weight = weight.astype(compute_dtype)
        self.weight = weight
        self.bias = bias
        self.compute_dtype = compute_dtype

    def __call__(self, input):
        return ipex_transformer_linear(input, self.weight, self.bias,
                                       compute_dtype=self.compute_dtype)

    # Keep the torch-ish spelling too.
    forward = __call__


if __name__ == "__main__":
    key = jax.random.PRNGKey(0)
    kx, kw, kb, kx2, kw2, kx3 = jax.random.split(key, 6)

    # Case 1: transformer-ish shapes, f32, with bias (single-K fast path).
    batch, seq, hidden, out_features = 2, 8, 256, 256
    x = jax.random.normal(kx, (batch, seq, hidden), dtype=jnp.float32)
    w = jax.random.normal(kw, (hidden, out_features), dtype=jnp.float32) * 0.02
    b = jax.random.normal(kb, (out_features,), dtype=jnp.float32) * 0.02

    mod = IPEXTransformerLinear(w, b)
    out = mod(x)
    jax.block_until_ready(out)
    ref = x @ w + b
    assert out.shape == (batch, seq, out_features)
    assert jnp.allclose(out, ref, atol=1e-4, rtol=1e-4)

    # Case 2: non-128-aligned shapes + bias=None (full-dim blocks, no padding,
    # no weight copy).
    x2 = jax.random.normal(kx2, (2, 37, 200), dtype=jnp.float32)
    w2 = jax.random.normal(kw2, (200, 300), dtype=jnp.float32) * 0.02
    out2 = IPEXTransformerLinear(w2, None)(x2)
    jax.block_until_ready(out2)
    ref2 = x2 @ w2
    assert out2.shape == (2, 37, 300)
    assert jnp.allclose(out2, ref2, atol=1e-4, rtol=1e-4)

    # Case 3: bf16 compute path (pre-cast weight) + forced small tiles to
    # exercise the multi-K accumulation / f32-scratch epilogue path.
    x3 = jax.random.normal(kx3, (4, 8, hidden), dtype=jnp.bfloat16)
    mod3 = IPEXTransformerLinear(w, b, compute_dtype=jnp.bfloat16)
    out3 = ipex_transformer_linear(x3, mod3.weight, mod3.bias,
                                   tm=16, tn=128, tk=128,
                                   compute_dtype=jnp.bfloat16)
    jax.block_until_ready(out3)
    ref3 = (x3.astype(jnp.float32)
            @ w.astype(jnp.bfloat16).astype(jnp.float32) + b)
    assert out3.shape == (4, 8, out_features)
    assert jnp.allclose(out3.astype(jnp.float32), ref3, atol=3e-2, rtol=3e-2)

    print("KERNEL_OK")
</pallas_src>

<mosaic_0001>
module attributes {stable_mosaic.version = 11 : i64} {
  func.func @kernel(%arg0: i32, %arg1: i32, %arg2: memref<16x256xf32, #tpu.memory_space<vmem>>, %arg3: memref<256x256xf32, #tpu.memory_space<vmem>>, %arg4: memref<1x256xf32, #tpu.memory_space<vmem>>, %arg5: memref<16x256xf32, #tpu.memory_space<vmem>>) attributes {dimension_semantics = [#tpu.dimension_semantics<parallel>, #tpu.dimension_semantics<parallel>], iteration_bounds = array<i64: 1, 1>, scalar_prefetch = 0 : i64, scratch_operands = 0 : i64, tpu.core_type = #tpu.core_type<tc>, window_params = [{transform_indices = @transform_0, window_bounds = array<i64: 16, 256>}, {transform_indices = @transform_1, window_bounds = array<i64: 256, 256>}, {transform_indices = @transform_2, window_bounds = array<i64: 1, 256>}, {transform_indices = @transform_3, window_bounds = array<i64: 16, 256>}]} {
    %c0 = arith.constant 0 : index
    %c0_0 = arith.constant 0 : index
    %0 = vector.load %arg2[%c0, %c0_0] : memref<16x256xf32, #tpu.memory_space<vmem>>, vector<16x256xf32>
    %c0_1 = arith.constant 0 : index
    %c0_2 = arith.constant 0 : index
    %1 = vector.load %arg3[%c0_1, %c0_2] : memref<256x256xf32, #tpu.memory_space<vmem>>, vector<256x256xf32>
    %cst = arith.constant dense<0.000000e+00> : vector<16x256xf32>
    %2 = tpu.matmul %0, %1, %cst {dimension_numbers = #tpu.dot_dimension_numbers<[1], [0], [0], [1], [0, 0, 1, 1], [], []>} : vector<16x256xf32>, vector<256x256xf32>, vector<16x256xf32> -> vector<16x256xf32>
    %c0_3 = arith.constant 0 : index
    %c0_4 = arith.constant 0 : index
    %3 = vector.load %arg4[%c0_3, %c0_4] : memref<1x256xf32, #tpu.memory_space<vmem>>, vector<1x256xf32>
    %4 = vector.broadcast %3 : vector<1x256xf32> to vector<16x256xf32>
    %5 = arith.addf %2, %4 : vector<16x256xf32>
    %c0_5 = arith.constant 0 : index
    %c0_6 = arith.constant 0 : index
    %6 = vector.load %arg5[%c0_5, %c0_6] : memref<16x256xf32, #tpu.memory_space<vmem>>, vector<16x256xf32>
    tpu.vector_store %arg5[%c0_5, %c0_6], %5 {strides = array<i32>} : memref<16x256xf32, #tpu.memory_space<vmem>>, vector<16x256xf32>,
    return
  }
  func.func @transform_0(%arg0: i32, %arg1: i32) -> (i32, i32) {
    %c0_i32 = arith.constant 0 : i32
    %c0_i32_0 = arith.constant 0 : i32
    return %arg0, %c0_i32 : i32, i32
  }
  func.func @transform_1(%arg0: i32, %arg1: i32) -> (i32, i32) {
    %c0_i32 = arith.constant 0 : i32
    %c0_i32_0 = arith.constant 0 : i32
    return %c0_i32, %arg1 : i32, i32
  }
  func.func @transform_2(%arg0: i32, %arg1: i32) -> (i32, i32) {
    %c0_i32 = arith.constant 0 : i32
    %c0_i32_0 = arith.constant 0 : i32
    return %c0_i32, %arg1 : i32, i32
  }
  func.func @transform_3(%arg0: i32, %arg1: i32) -> (i32, i32) {
    %c0_i32 = arith.constant 0 : i32
    return %arg0, %arg1 : i32, i32
  }
}

</mosaic_0001>

<llo_original>
// kernel: ipex_transformer_linear.1
$region0: #{ipex_transformer_linear.1}
  #allocation0 [shape = 'u32[]', space=smem, size = 0x4, offset = 0x4, fixed_abs, tag = 'smem constant byte address 0x4 - core index']
  #allocation1 [shape = 'u32[72,128]{1,0:T(1,128)}', space=vmem, size = 0x9000, scoped, tag = 'internal scratch']
  %s0 = inlined_call_operand.hbm [shape: f32[16,256], index: 0, kind: input, shape index: {}]
  %s1 = inlined_call_operand.hbm [shape: f32[256,256], index: 1, kind: input, shape index: {}]
  %s2 = inlined_call_operand.vmem [shape: f32[1,256], index: 2, kind: input, shape index: {}]
  %s3 = inlined_call_operand.hbm [shape: f32[16,256], index: 3, kind: output, shape index: {}]
  %s4 = sld [smem:[#allocation0]]
  $region30: #{ipex_transformer_linear.1} parent=0
    _
  %s6 = ssub.s32 1, %s4
  %s7 = scalar_select 0, %s6, %s4
  $region1: #{ipex_transformer_linear.1} parent=0
    #allocation2 [shape = 'u8[16384]{0}', space=vmem, size = 0x4000, scoped, tag = 'input window, operand 0, single buffered']
    #allocation3 [shape = 's32[1]{0}', space=sflag, size = 0x4, scoped, tag = 'scoped memory for ipex_transformer_linear.1']
    #allocation4 [shape = 's32[1]{0}', space=sflag, size = 0x4, scoped, tag = 'scoped memory for ipex_transformer_linear.1']
    #allocation5 [shape = 'u8[262144]{0}', space=vmem, size = 0x40000, scoped, tag = 'input window, operand 1, single buffered']
    #allocation6 [shape = 's32[1]{0}', space=sflag, size = 0x4, scoped, tag = 'scoped memory for ipex_transformer_linear.1']
    #allocation7 [shape = 'u8[16384]{0}', space=vmem, size = 0x4000, scoped, tag = 'output window, operand 0, single buffered']
    %8 = vsyncpa [#allocation3], 0
    %9 = vsyncpa [#allocation6], 0
    %10 = vsyncpa [#allocation4], 0
    // Predicated region
    $region2: #{ipex_transformer_linear.1} parent=1 // pred_check
      _
    $region3: #{ipex_transformer_linear.1} parent=1 // pred_check_branch
      %12 = sbr.rel (0) target = $region5
    $region4: #{ipex_transformer_linear.1} parent=1 // pred_region
      %14 = vsyncadd [#allocation3], 0
      %s15 = sshll.u32 %s0, 4
      %s16 = int_to_ptr.hbm [resolvable:$true] %s15
      %s17 = sshll.u32 [#allocation2], 4
      %s18 = int_to_ptr.vmem [resolvable:$true] %s17
      %23 = dma.hbm_to_vmem [thread:$0]  %s16, 512, %s18, [#allocation3], 256, 256, 16
    $region5: #{ipex_transformer_linear.1} parent=1 // pred_fallthru
      _
    // Predicated region
    $region6: #{ipex_transformer_linear.1} parent=1 // pred_check
      _
    $region7: #{ipex_transformer_linear.1} parent=1 // pred_check_branch
      %25 = sbr.rel (0) target = $region9
    $region8: #{ipex_transformer_linear.1} parent=1 // pred_region
      %27 = vsyncadd [#allocation6], 0
      %s28 = sshll.u32 %s1, 4
      %s29 = int_to_ptr.hbm [resolvable:$true] %s28
      %s30 = sshll.u32 [#allocation5], 4
      %s31 = int_to_ptr.vmem [resolvable:$true] %s30
      %36 = dma.hbm_to_vmem [thread:$0]  %s29, 8192, %s31, [#allocation6], 256, 256, 16
    $region9: #{ipex_transformer_linear.1} parent=1 // pred_fallthru
      _
    // Predicated region
    $region10: #{ipex_transformer_linear.1} parent=1 // pred_check
      _
    $region11: #{ipex_transformer_linear.1} parent=1 // pred_check_branch
      %38 = sbr.rel (0) target = $region13
    $region12: #{ipex_transformer_linear.1} parent=1 // pred_region
      _
    $region13: #{ipex_transformer_linear.1} parent=1 // pred_fallthru
      _
    // Predicated region
    $region14: #{ipex_transformer_linear.1} parent=1 // pred_check
      _
    $region15: #{ipex_transformer_linear.1} parent=1 // pred_check_branch
      %40 = sbr.rel (0) target = $region17
    $region16: #{ipex_transformer_linear.1} parent=1 // pred_region
      %42 = dma.done [#allocation3], 512
    $region17: #{ipex_transformer_linear.1} parent=1 // pred_fallthru
      _
    // Predicated region
    $region18: #{ipex_transformer_linear.1} parent=1 // pred_check
      _
    $region19: #{ipex_transformer_linear.1} parent=1 // pred_check_branch
      %44 = sbr.rel (0) target = $region21
    $region20: #{ipex_transformer_linear.1} parent=1 // pred_region
      %46 = dma.done [#allocation6], 8192
    $region21: #{ipex_transformer_linear.1} parent=1 // pred_fallthru
      _
    %v47 = vld [vmem:[#allocation2] sm:$0xff]
    %v48 = vld [vmem:[#allocation2 + $0x8] sm:$0xff]
    %v49 = vld [vmem:[#allocation2 + $0x10] sm:$0xff]
    %v50 = vld [vmem:[#allocation2 + $0x18] sm:$0xff]
    %v51 = vld [vmem:[#allocation5] sm:$0xff]
    %v52 = vld [vmem:[#allocation5 + $0x8] sm:$0xff]
    %v53 = vld [vmem:[#allocation5 + $0x10] sm:$0xff]
    %v54 = vld [vmem:[#allocation5 + $0x18] sm:$0xff]
    %v55 = vld [vmem:[#allocation5 + $0x20] sm:$0xff]
    %v56 = vld [vmem:[#allocation5 + $0x28] sm:$0xff]
    %v57 = vld [vmem:[#allocation5 + $0x30] sm:$0xff]
    %v58 = vld [vmem:[#allocation5 + $0x38] sm:$0xff]
    %v59 = vld [vmem:[#allocation5 + $0x40] sm:$0xff]
    %v60 = vld [vmem:[#allocation5 + $0x48] sm:$0xff]
    %v61 = vld [vmem:[#allocation5 + $0x50] sm:$0xff]
    %v62 = vld [vmem:[#allocation5 + $0x58] sm:$0xff]
    %v63 = vld [vmem:[#allocation5 + $0x60] sm:$0xff]
    %v64 = vld [vmem:[#allocation5 + $0x68] sm:$0xff]
    %v65 = vld [vmem:[#allocation5 + $0x70] sm:$0xff]
    %v66 = vld [vmem:[#allocation5 + $0x78] sm:$0xff]
    %v67 = vld [vmem:[#allocation5 + $0x80] sm:$0xff]
    %v68 = vld [vmem:[#allocation5 + $0x88] sm:$0xff]
    %v69 = vld [vmem:[#allocation5 + $0x90] sm:$0xff]
    %v70 = vld [vmem:[#allocation5 + $0x98] sm:$0xff]
    %v71 = vld [vmem:[#allocation5 + $0xa0] sm:$0xff]
    %v72 = vld [vmem:[#allocation5 + $0xa8] sm:$0xff]
    %v73 = vld [vmem:[#allocation5 + $0xb0] sm:$0xff]
    %v74 = vld [vmem:[#allocation5 + $0xb8] sm:$0xff]
    %v75 = vld [vmem:[#allocation5 + $0xc0] sm:$0xff]
    %v76 = vld [vmem:[#allocation5 + $0xc8] sm:$0xff]
    %v77 = vld [vmem:[#allocation5 + $0xd0] sm:$0xff]
    %v78 = vld [vmem:[#allocation5 + $0xd8] sm:$0xff]
    %v79 = vld [vmem:[#allocation5 + $0xe0] sm:$0xff]
    %v80 = vld [vmem:[#allocation5 + $0xe8] sm:$0xff]
    %v81 = vld [vmem:[#allocation5 + $0xf0] sm:$0xff]
    %v82 = vld [vmem:[#allocation5 + $0xf8] sm:$0xff]
    %v83 = vld [vmem:[#allocation5 + $0x100] sm:$0xff]
    %v84 = vld [vmem:[#allocation5 + $0x108] sm:$0xff]
    %v85 = vld [vmem:[#allocation5 + $0x110] sm:$0xff]
    %v86 = vld [vmem:[#allocation5 + $0x118] sm:$0xff]
    %v87 = vld [vmem:[#allocation5 + $0x120] sm:$0xff]
    %v88 = vld [vmem:[#allocation5 + $0x128] sm:$0xff]
    %v89 = vld [vmem:[#allocation5 + $0x130] sm:$0xff]
    %v90 = vld [vmem:[#allocation5 + $0x138] sm:$0xff]
    %v91 = vld [vmem:[#allocation5 + $0x140] sm:$0xff]
    %v92 = vld [vmem:[#allocation5 + $0x148] sm:$0xff]
    %v93 = vld [vmem:[#allocation5 + $0x150] sm:$0xff]
    %v94 = vld [vmem:[#allocation5 + $0x158] sm:$0xff]
    %v95 = vld [vmem:[#allocation5 + $0x160] sm:$0xff]
    %v96 = vld [vmem:[#allocation5 + $0x168] sm:$0xff]
    %v97 = vld [vmem:[#allocation5 + $0x170] sm:$0xff]
    %v98 = vld [vmem:[#allocation5 + $0x178] sm:$0xff]
    %v99 = vld [vmem:[#allocation5 + $0x180] sm:$0xff]
    %v100 = vld [vmem:[#allocation5 + $0x188] sm:$0xff]
    %v101 = vld [vmem:[#allocation5 + $0x190] sm:$0xff]
    %v102 = vld [vmem:[#allocation5 + $0x198] sm:$0xff]
    %v103 = vld [vmem:[#allocation5 + $0x1a0] sm:$0xff]
    %v104 = vld [vmem:[#allocation5 + $0x1a8] sm:$0xff]
    %v105 = vld [vmem:[#allocation5 + $0x1b0] sm:$0xff]
    %v106 = vld [vmem:[#allocation5 + $0x1b8] sm:$0xff]
    %v107 = vld [vmem:[#allocation5 + $0x1c0] sm:$0xff]
    %v108 = vld [vmem:[#allocation5 + $0x1c8] sm:$0xff]
    %v109 = vld [vmem:[#allocation5 + $0x1d0] sm:$0xff]
    %v110 = vld [vmem:[#allocation5 + $0x1d8] sm:$0xff]
    %v111 = vld [vmem:[#allocation5 + $0x1e0] sm:$0xff]
    %v112 = vld [vmem:[#allocation5 + $0x1e8] sm:$0xff]
    %v113 = vld [vmem:[#allocation5 + $0x1f0] sm:$0xff]
    %v114 = vld [vmem:[#allocation5 + $0x1f8] sm:$0xff]
    %v115 = vld [vmem:[%s2] sm:$0x3]
    %v117 = vperm.slane %v115, 0
    %v118 = vperm.slane %v115, 1
    %121 = vmatpush.msra.mxu0 %v81
    %122 = vmatpush.msra.mxu0 %v79
    %123 = vmatpush.msra.mxu0 %v77
    %124 = vmatpush.msra.mxu0 %v75
    %125 = vmatpush.msra.mxu0 %v73
    %126 = vmatpush.msra.mxu0 %v71
    %127 = vmatpush.msra.mxu0 %v69
    %128 = vmatpush.msra.mxu0 %v67
    %129 = vmatpush.msra.mxu0 %v65
    %130 = vmatpush.msra.mxu0 %v63
    %131 = vmatpush.msra.mxu0 %v61
    %132 = vmatpush.msra.mxu0 %v59
    %133 = vmatpush.msra.mxu0 %v57
    %134 = vmatpush.msra.mxu0 %v55
    %135 = vmatpush.msra.mxu0 %v53
    %136 = vmatpush.msra.mxu0 %v51
    %137 = vmatmul.f32.gmra.mxu0 %v47
    %v138 = vpop.f32.mrf.mxu0
    %v139 = vadd.f32 %v117, %v138
    %140 = vmatmul.f32.gmra.mxu0 %v49
    %v141 = vpop.f32.mrf.mxu0
    %v142 = vadd.f32 %v117, %v141
    %143 = vdwg.mxu0
    %144 = vmatpush.msra.mxu0 %v113
    %145 = vmatpush.msra.mxu0 %v111
    %146 = vmatpush.msra.mxu0 %v109
    %147 = vmatpush.msra.mxu0 %v107
    %148 = vmatpush.msra.mxu0 %v105
    %149 = vmatpush.msra.mxu0 %v103
    %150 = vmatpush.msra.mxu0 %v101
    %151 = vmatpush.msra.mxu0 %v99
    %152 = vmatpush.msra.mxu0 %v97
    %153 = vmatpush.msra.mxu0 %v95
    %154 = vmatpush.msra.mxu0 %v93
    %155 = vmatpush.msra.mxu0 %v91
    %156 = vmatpush.msra.mxu0 %v89
    %157 = vmatpush.msra.mxu0 %v87
    %158 = vmatpush.msra.mxu0 %v85
    %159 = vmatpush.msra.mxu0 %v83
    %160 = vmatmul.f32.gmra.mxu0 %v48
    %v161 = vpop.f32.mrf.mxu0
    %v162 = vadd.f32 %v139, %v161
    %163 = vmatmul.f32.gmra.mxu0 %v50
    %v164 = vpop.f32.mrf.mxu0
    %v165 = vadd.f32 %v142, %v164
    %166 = vdwg.mxu0
    %167 = vmatpush.msra.mxu0 %v82
    %168 = vmatpush.msra.mxu0 %v80
    %169 = vmatpush.msra.mxu0 %v78
    %170 = vmatpush.msra.mxu0 %v76
    %171 = vmatpush.msra.mxu0 %v74
    %172 = vmatpush.msra.mxu0 %v72
    %173 = vmatpush.msra.mxu0 %v70
    %174 = vmatpush.msra.mxu0 %v68
    %175 = vmatpush.msra.mxu0 %v66
    %176 = vmatpush.msra.mxu0 %v64
    %177 = vmatpush.msra.mxu0 %v62
    %178 = vmatpush.msra.mxu0 %v60
    %179 = vmatpush.msra.mxu0 %v58
    %180 = vmatpush.msra.mxu0 %v56
    %181 = vmatpush.msra.mxu0 %v54
    %182 = vmatpush.msra.mxu0 %v52
    %183 = vmatmul.f32.gmra.mxu0 %v47
    %v184 = vpop.f32.mrf.mxu0
    %v185 = vadd.f32 %v118, %v184
    %186 = vmatmul.f32.gmra.mxu0 %v49
    %v187 = vpop.f32.mrf.mxu0
    %v188 = vadd.f32 %v118, %v187
    %189 = vdwg.mxu0
    %190 = vmatpush.msra.mxu0 %v114
    %191 = vmatpush.msra.mxu0 %v112
    %192 = vmatpush.msra.mxu0 %v110
    %193 = vmatpush.msra.mxu0 %v108
    %194 = vmatpush.msra.mxu0 %v106
    %195 = vmatpush.msra.mxu0 %v104
    %196 = vmatpush.msra.mxu0 %v102
    %197 = vmatpush.msra.mxu0 %v100
    %198 = vmatpush.msra.mxu0 %v98
    %199 = vmatpush.msra.mxu0 %v96
    %200 = vmatpush.msra.mxu0 %v94
    %201 = vmatpush.msra.mxu0 %v92
    %202 = vmatpush.msra.mxu0 %v90
    %203 = vmatpush.msra.mxu0 %v88
    %204 = vmatpush.msra.mxu0 %v86
    %205 = vmatpush.msra.mxu0 %v84
    %206 = vmatmul.f32.gmra.mxu0 %v48
    %v207 = vpop.f32.mrf.mxu0
    %v208 = vadd.f32 %v185, %v207
    %209 = vmatmul.f32.gmra.mxu0 %v50
    %v210 = vpop.f32.mrf.mxu0
    %v211 = vadd.f32 %v188, %v210
    %212 = vdwg.mxu0
    %213 = vst [vmem:[#allocation7] sm:$0xff] %v162
    %214 = vst [vmem:[#allocation7 + $0x8] sm:$0xff] %v208
    %215 = vst [vmem:[#allocation7 + $0x10] sm:$0xff] %v165
    %216 = vst [vmem:[#allocation7 + $0x18] sm:$0xff] %v211
    // Predicated region
    $region22: #{ipex_transformer_linear.1} parent=1 // pred_check
      _
    $region23: #{ipex_transformer_linear.1} parent=1 // pred_check_branch
      %218 = sbr.rel (0) target = $region25
    $region24: #{ipex_transformer_linear.1} parent=1 // pred_region
      %220 = vsyncadd [#allocation4], 0
      %s221 = sshll.u32 [#allocation7], 4
      %s222 = int_to_ptr.vmem [resolvable:$true] %s221
      %s223 = sshll.u32 %s3, 4
      %s224 = int_to_ptr.hbm [resolvable:$true] %s223
      %229 = dma.vmem_to_hbm [thread:$0]  %s222, 512, %s224, [#allocation4], 256, 256, 16
    $region25: #{ipex_transformer_linear.1} parent=1 // pred_fallthru
      _
    // Predicated region
    $region26: #{ipex_transformer_linear.1} parent=1 // pred_check
      _
    $region27: #{ipex_transformer_linear.1} parent=1 // pred_check_branch
      %231 = sbr.rel (0) target = $region29
    $region28: #{ipex_transformer_linear.1} parent=1 // pred_region
      %233 = dma.done [#allocation4], 512
    $region29: #{ipex_transformer_linear.1} parent=1 // pred_fallthru
      _
    %234 = vsyncpa [#allocation3], 1
    %235 = vsyncpa [#allocation6], 1
    %236 = vsyncpa [#allocation4], 1

</llo_original>
